<compile_context>
chip_gen: v7x
topology: tpu7x:2x2x1
jax: 0.10.0
libtpu: 0.0.40
codegen_flags: <defaults>
</compile_context>

<pallas_src>
import jax
import jax.numpy as jnp
from jax.experimental import pallas as pl
from jax.experimental.pallas import tpu as pltpu


def _round_up(n, m):
    return (n + m - 1) // m * m


# --------------------------------------------------------------------------
# Kernels
# --------------------------------------------------------------------------
def _ffn_kernel_f32(x_ref, w12_ref, b12_ref, w3_ref, b3_ref, o_ref):
    """f32 output: accumulate the projection directly into the resident o_ref."""
    j = pl.program_id(1)
    tn = w3_ref.shape[0]

    x = x_ref[...].astype(w12_ref.dtype)                      # (tm, hidden)
    # Fused SwiGLU branches: one matmul against [W1_j | W2_j].
    ab = jnp.dot(x, w12_ref[...],
                 preferred_element_type=jnp.float32) + b12_ref[...]
    a = ab[:, :tn]
    b = ab[:, tn:]
    h = a * (b * jax.nn.sigmoid(b))                           # (tm, tn) f32
    partial = jnp.dot(h.astype(w3_ref.dtype), w3_ref[...],
                      preferred_element_type=jnp.float32)     # (tm, hidden)

    @pl.when(j == 0)
    def _():
        o_ref[...] = partial + b3_ref[...]                    # b3 added once

    @pl.when(j > 0)
    def _():
        o_ref[...] += partial


def _ffn_kernel_acc(x_ref, w12_ref, b12_ref, w3_ref, b3_ref, o_ref, acc_ref):
    """Narrow output dtype: accumulate in an f32 VMEM scratch, cast at the end."""
    j = pl.program_id(1)
    tn = w3_ref.shape[0]

    x = x_ref[...].astype(w12_ref.dtype)
    ab = jnp.dot(x, w12_ref[...],
                 preferred_element_type=jnp.float32) + b12_ref[...]
    a = ab[:, :tn]
    b = ab[:, tn:]
    h = a * (b * jax.nn.sigmoid(b))
    partial = jnp.dot(h.astype(w3_ref.dtype), w3_ref[...],
                      preferred_element_type=jnp.float32)

    @pl.when(j == 0)
    def _():
        acc_ref[...] = jnp.zeros_like(acc_ref)

    acc_ref[...] += partial

    @pl.when(j == pl.num_programs(1) - 1)
    def _():
        o_ref[...] = (acc_ref[...] + b3_ref[...]).astype(o_ref.dtype)


# --------------------------------------------------------------------------
# Tiling / VMEM planning
# --------------------------------------------------------------------------
def _vmem_budget_bytes():
    cap = 64 << 20                      # conservative fallback (v7x per-core VMEM)
    try:
        info = pltpu.get_tpu_info()
        cap = int(getattr(info, "vmem_capacity_bytes", cap) or cap)
    except Exception:
        pass
    return int(cap * 0.72), cap         # leave headroom for compiler scratch


def _vmem_need(tm, tn, hidden, xb, wb, ob, use_scratch):
    w_tiles = 3 * hidden * tn * wb + (2 * tn + hidden) * 4    # W12 + W3 + biases
    io_tiles = tm * hidden * (xb + ob)                        # x tile + out tile
    scratch = tm * hidden * 4 if use_scratch else 0
    interm = tm * 2 * tn * 4                                  # f32 gated activation
    return 2 * (w_tiles + io_tiles) + scratch + interm        # x2: double-buffered


def _choose_tn(ffn):
    if ffn <= 256:
        return ffn
    for cand in (256, 512, 128):        # prefer 256: keeps MXU N full, frees VMEM for tm
        if ffn % cand == 0:
            return cand
    return 256                          # ffn will be zero-padded once in prepare


def _choose_tm(M, tn, hidden, xb, wb, ob, use_scratch, budget):
    m_cap = _round_up(M, 8)
    if m_cap <= 256:
        # TODO(synk): decode-shaped calls (tiny M) leave one v7x TensorCore idle;
        # splitting the ffn axis across cores would recover it.
        return m_cap
    candidates = [c for c in (1024, 768, 512, 256, 128, 64, 32, 16, 8) if c <= m_cap]
    fitting = [c for c in candidates
               if _vmem_need(c, tn, hidden, xb, wb, ob, use_scratch) <= budget]
    if not fitting:
        return 8
    best = fitting[0]
    for c in fitting:                   # prefer a tile dividing M (no per-call row pad)
        if M % c == 0:
            return c
    return best


# --------------------------------------------------------------------------
# One-time parameter preparation (outside the hot path)
# --------------------------------------------------------------------------
def prepare_ffn_params(w1, b1, w2, b2, w3, b3, *, tn=None, weight_dtype=None):
    """Fuse W1/W2 block-interleaved, optionally pad ffn / cast weights to bf16.

    Weights are stored pre-transposed as [in_dim, out_dim] so the kernel does a
    plain `x @ W` on the MXU.  Biases are kept in f32.
    """
    hidden, ffn = w1.shape
    if weight_dtype is not None:
        w1 = w1.astype(weight_dtype)
        w2 = w2.astype(weight_dtype)
        w3 = w3.astype(weight_dtype)
    b1 = b1.astype(jnp.float32).reshape(1, ffn)
    b2 = b2.astype(jnp.float32).reshape(1, ffn)
    b3 = b3.astype(jnp.float32).reshape(1, hidden)

    if tn is None:
        tn = _choose_tn(ffn)
    fp = _round_up(ffn, tn)
    if fp != ffn:                       # rare; padded columns contribute exactly 0
        pad = fp - ffn
        w1 = jnp.pad(w1, ((0, 0), (0, pad)))
        w2 = jnp.pad(w2, ((0, 0), (0, pad)))
        b1 = jnp.pad(b1, ((0, 0), (0, pad)))
        b2 = jnp.pad(b2, ((0, 0), (0, pad)))
        w3 = jnp.pad(w3, ((0, pad), (0, 0)))

    nb = fp // tn
    # Block-interleave so that ffn tile j of width 2*tn is [W1_j | W2_j].
    w12 = jnp.concatenate(
        [w1.reshape(hidden, nb, 1, tn), w2.reshape(hidden, nb, 1, tn)],
        axis=2).reshape(hidden, 2 * fp)
    b12 = jnp.concatenate(
        [b1.reshape(1, nb, 1, tn), b2.reshape(1, nb, 1, tn)],
        axis=2).reshape(1, 2 * fp)

    return dict(w12=w12, b12=b12, w3=w3, b3=b3, hidden=hidden, ffn=fp, tn=tn)


# --------------------------------------------------------------------------
# Forward pass
# --------------------------------------------------------------------------
def transformer_ffn(x, params, *, tm=None):
    """x: (..., hidden).  params: output of prepare_ffn_params."""
    hidden = params["hidden"]
    w12, b12, w3, b3 = params["w12"], params["b12"], params["w3"], params["b3"]
    tn, ffn = params["tn"], params["ffn"]

    orig_shape = x.shape
    x2 = x.reshape(-1, hidden)
    M = x2.shape[0]
    out_dtype = x.dtype
    f32_out = jnp.dtype(out_dtype) == jnp.dtype(jnp.float32)

    xb = jnp.dtype(x2.dtype).itemsize
    wb = jnp.dtype(w12.dtype).itemsize
    ob = jnp.dtype(out_dtype).itemsize

    budget, vmem_cap = _vmem_budget_bytes()
    if tm is None:
        tm = _choose_tm(M, tn, hidden, xb, wb, ob, not f32_out, budget)
    tm = min(tm, _round_up(M, 8))

    mp = _round_up(M, tm)
    if mp != M:
        x2 = jnp.pad(x2, ((0, mp - M), (0, 0)))

    grid = (mp // tm, ffn // tn)

    need = _vmem_need(tm, tn, hidden, xb, wb, ob, not f32_out)
    vmem_limit = int(min(max(need * 1.25 + (2 << 20), 32 << 20), vmem_cap * 0.94))

    cost = pl.CostEstimate(
        flops=int(6 * mp * hidden * ffn + 4 * mp * ffn),      # 3 matmuls + gating
        transcendentals=int(mp * ffn),                        # sigmoid
        bytes_accessed=int(
            x2.size * xb + mp * hidden * ob
            + grid[0] * ((w12.size + w3.size) * wb            # weights re-streamed
                         + (b12.size + b3.size) * 4)),        # once per row tile
    )

    kernel = _ffn_kernel_f32 if f32_out else _ffn_kernel_acc
    scratch = [] if f32_out else [pltpu.VMEM((tm, hidden), jnp.float32)]

    out = pl.pallas_call(
        kernel,
        out_shape=jax.ShapeDtypeStruct((mp, hidden), out_dtype),
        grid_spec=pltpu.PrefetchScalarGridSpec(
            num_scalar_prefetch=0,
            grid=grid,
            in_specs=[
                pl.BlockSpec((tm, hidden),     lambda i, j: (i, 0)),   # x row tile
                pl.BlockSpec((hidden, 2 * tn), lambda i, j: (0, j)),   # [W1_j | W2_j]
                pl.BlockSpec((1, 2 * tn),      lambda i, j: (0, j)),   # [b1_j | b2_j]
                pl.BlockSpec((tn, hidden),     lambda i, j: (j, 0)),   # W3 row tile
                pl.BlockSpec((1, hidden),      lambda i, j: (0, 0)),   # b3
            ],
            out_specs=pl.BlockSpec((tm, hidden), lambda i, j: (i, 0)),
            scratch_shapes=scratch,
        ),
        compiler_params=pltpu.CompilerParams(
            dimension_semantics=("parallel", "arbitrary"),
            vmem_limit_bytes=vmem_limit,
        ),
        cost_estimate=cost,
    )(x2, w12, b12, w3, b3)

    if mp != M:
        out = out[:M]
    return out.reshape(orig_shape[:-1] + (hidden,))


def reference_ffn(x, w1, b1, w2, b2, w3, b3):
    a = x @ w1 + b1
    b = x @ w2 + b2
    h = a * (b * jax.nn.sigmoid(b))
    return h @ w3 + b3


if __name__ == "__main__":
    batch, seq, hidden_dim, ffn_dim = 2, 8, 32, 64
    M = batch * seq

    key = jax.random.PRNGKey(0)
    kx, k1, k2, k3, kb1, kb2, kb3 = jax.random.split(key, 7)

    x = jax.random.normal(kx, (M, hidden_dim), dtype=jnp.float32)
    # Synthetic parameters; nn.Linear weights stored pre-transposed as [in, out].
    w1 = jax.random.normal(k1, (hidden_dim, ffn_dim), dtype=jnp.float32) * 0.1
    b1 = jax.random.normal(kb1, (1, ffn_dim), dtype=jnp.float32) * 0.1
    w2 = jax.random.normal(k2, (hidden_dim, ffn_dim), dtype=jnp.float32) * 0.1
    b2 = jax.random.normal(kb2, (1, ffn_dim), dtype=jnp.float32) * 0.1
    w3 = jax.random.normal(k3, (ffn_dim, hidden_dim), dtype=jnp.float32) * 0.1
    b3 = jax.random.normal(kb3, (1, hidden_dim), dtype=jnp.float32) * 0.1

    ref = reference_ffn(x, w1, b1, w2, b2, w3, b3)

    # f32 weight path — exact vs. reference.
    params_f32 = prepare_ffn_params(w1, b1, w2, b2, w3, b3)
    out = jax.block_until_ready(transformer_ffn(x, params_f32))
    assert out.shape == (M, hidden_dim)
    assert jnp.allclose(out, ref, atol=1e-5, rtol=1e-5)

    # bf16 weight path (MXU fast path; f32 accumulation/gating) — loose tolerance.
    params_bf16 = prepare_ffn_params(w1, b1, w2, b2, w3, b3,
                                     weight_dtype=jnp.bfloat16)
    out_bf16 = jax.block_until_ready(transformer_ffn(x, params_bf16))
    assert jnp.allclose(out_bf16.astype(jnp.float32), ref, atol=1e-1, rtol=1e-1)

    print("KERNEL_OK")
</pallas_src>

<mosaic_0001>
module attributes {stable_mosaic.version = 11 : i64} {
  func.func @_ffn_kernel_f32(%arg0: i32, %arg1: i32, %arg2: memref<16x32xf32, #tpu.memory_space<vmem>>, %arg3: memref<32x128xf32, #tpu.memory_space<vmem>>, %arg4: memref<1x128xf32, #tpu.memory_space<vmem>>, %arg5: memref<64x32xf32, #tpu.memory_space<vmem>>, %arg6: memref<1x32xf32, #tpu.memory_space<vmem>>, %arg7: memref<16x32xf32, #tpu.memory_space<vmem>>) attributes {dimension_semantics = [#tpu.dimension_semantics<parallel>, #tpu.dimension_semantics<arbitrary>], iteration_bounds = array<i64: 1, 1>, scalar_prefetch = 0 : i64, scratch_operands = 0 : i64, tpu.core_type = #tpu.core_type<tc>, window_params = [{transform_indices = @transform_0, window_bounds = array<i64: 16, 32>}, {transform_indices = @transform_1, window_bounds = array<i64: 32, 128>}, {transform_indices = @transform_2, window_bounds = array<i64: 1, 128>}, {transform_indices = @transform_3, window_bounds = array<i64: 64, 32>}, {pipeline_mode = #tpu.pipeline_mode<synchronous>, transform_indices = @transform_4, window_bounds = array<i64: 1, 32>}, {transform_indices = @transform_5, window_bounds = array<i64: 16, 32>}]} {
    %c0 = arith.constant 0 : index
    %c0_0 = arith.constant 0 : index
    %0 = vector.load %arg2[%c0, %c0_0] : memref<16x32xf32, #tpu.memory_space<vmem>>, vector<16x32xf32>
    %c0_1 = arith.constant 0 : index
    %c0_2 = arith.constant 0 : index
    %1 = vector.load %arg3[%c0_1, %c0_2] : memref<32x128xf32, #tpu.memory_space<vmem>>, vector<32x128xf32>
    %cst = arith.constant dense<0.000000e+00> : vector<16x128xf32>
    %2 = tpu.matmul %0, %1, %cst {dimension_numbers = #tpu.dot_dimension_numbers<[1], [0], [0], [1], [0, 0, 1, 1], [], []>} : vector<16x32xf32>, vector<32x128xf32>, vector<16x128xf32> -> vector<16x128xf32>
    %c0_3 = arith.constant 0 : index
    %c0_4 = arith.constant 0 : index
    %3 = vector.load %arg4[%c0_3, %c0_4] : memref<1x128xf32, #tpu.memory_space<vmem>>, vector<1x128xf32>
    %4 = vector.broadcast %3 : vector<1x128xf32> to vector<16x128xf32>
    %5 = arith.addf %2, %4 : vector<16x128xf32>
    %6 = vector.extract_strided_slice %5 {offsets = [0, 0], sizes = [16, 64], strides = [1, 1]} : vector<16x128xf32> to vector<16x64xf32>
    %7 = vector.extract_strided_slice %5 {offsets = [0, 64], sizes = [16, 64], strides = [1, 1]} : vector<16x128xf32> to vector<16x64xf32>
    %8 = arith.negf %7 : vector<16x64xf32>
    %9 = math.exp %8 : vector<16x64xf32>
    %cst_5 = arith.constant 1.000000e+00 : f32
    %10 = vector.broadcast %cst_5 : f32 to vector<16x64xf32>
    %11 = arith.addf %10, %9 : vector<16x64xf32>
    %12 = arith.divf %10, %11 : vector<16x64xf32>
    %13 = arith.mulf %7, %12 : vector<16x64xf32>
    %14 = arith.mulf %6, %13 : vector<16x64xf32>
    %c0_6 = arith.constant 0 : index
    %c0_7 = arith.constant 0 : index
    %15 = vector.load %arg5[%c0_6, %c0_7] : memref<64x32xf32, #tpu.memory_space<vmem>>, vector<64x32xf32>
    %cst_8 = arith.constant dense<0.000000e+00> : vector<16x32xf32>
    %16 = tpu.matmul %14, %15, %cst_8 {dimension_numbers = #tpu.dot_dimension_numbers<[1], [0], [0], [1], [0, 0, 1, 1], [], []>} : vector<16x64xf32>, vector<64x32xf32>, vector<16x32xf32> -> vector<16x32xf32>
    %c0_i32 = arith.constant 0 : i32
    %17 = arith.cmpi eq, %arg1, %c0_i32 : i32
    %18 = arith.extui %17 : i1 to i32
    %c0_i32_9 = arith.constant 0 : i32
    %19 = arith.cmpi ne, %18, %c0_i32_9 : i32
    scf.if %19 {
      %c0_12 = arith.constant 0 : index
      %c0_13 = arith.constant 0 : index
      %23 = vector.load %arg6[%c0_12, %c0_13] : memref<1x32xf32, #tpu.memory_space<vmem>>, vector<1x32xf32>
      %24 = vector.broadcast %23 : vector<1x32xf32> to vector<16x32xf32>
      %25 = arith.addf %16, %24 : vector<16x32xf32>
      %c0_14 = arith.constant 0 : index
      %c0_15 = arith.constant 0 : index
      %26 = vector.load %arg7[%c0_14, %c0_15] : memref<16x32xf32, #tpu.memory_space<vmem>>, vector<16x32xf32>
      tpu.vector_store %arg7[%c0_14, %c0_15], %25 {strides = array<i32>} : memref<16x32xf32, #tpu.memory_space<vmem>>, vector<16x32xf32>,
    } else {
    }
    %c0_i32_10 = arith.constant 0 : i32
    %20 = arith.cmpi sgt, %arg1, %c0_i32_10 : i32
    %21 = arith.extui %20 : i1 to i32
    %c0_i32_11 = arith.constant 0 : i32
    %22 = arith.cmpi ne, %21, %c0_i32_11 : i32
    scf.if %22 {
      %c0_12 = arith.constant 0 : index
      %c0_13 = arith.constant 0 : index
      %23 = vector.load %arg7[%c0_12, %c0_13] : memref<16x32xf32, #tpu.memory_space<vmem>>, vector<16x32xf32>
      %24 = arith.addf %23, %16 : vector<16x32xf32>
      %c0_14 = arith.constant 0 : index
      %c0_15 = arith.constant 0 : index
      %25 = vector.load %arg7[%c0_14, %c0_15] : memref<16x32xf32, #tpu.memory_space<vmem>>, vector<16x32xf32>
      tpu.vector_store %arg7[%c0_14, %c0_15], %24 {strides = array<i32>} : memref<16x32xf32, #tpu.memory_space<vmem>>, vector<16x32xf32>,
    } else {
    }
    return
  }
  func.func @transform_0(%arg0: i32, %arg1: i32) -> (i32, i32) {
    %c0_i32 = arith.constant 0 : i32
    %c0_i32_0 = arith.constant 0 : i32
    return %arg0, %c0_i32 : i32, i32
  }
  func.func @transform_1(%arg0: i32, %arg1: i32) -> (i32, i32) {
    %c0_i32 = arith.constant 0 : i32
    %c0_i32_0 = arith.constant 0 : i32
    return %c0_i32, %arg1 : i32, i32
  }
  func.func @transform_2(%arg0: i32, %arg1: i32) -> (i32, i32) {
    %c0_i32 = arith.constant 0 : i32
    %c0_i32_0 = arith.constant 0 : i32
    return %c0_i32, %arg1 : i32, i32
  }
  func.func @transform_3(%arg0: i32, %arg1: i32) -> (i32, i32) {
    %c0_i32 = arith.constant 0 : i32
    %c0_i32_0 = arith.constant 0 : i32
    return %arg1, %c0_i32 : i32, i32
  }
  func.func @transform_4(%arg0: i32, %arg1: i32) -> (i32, i32) {
    %c0_i32 = arith.constant 0 : i32
    %c0_i32_0 = arith.constant 0 : i32
    %c0_i32_1 = arith.constant 0 : i32
    return %c0_i32, %c0_i32_0 : i32, i32
  }
  func.func @transform_5(%arg0: i32, %arg1: i32) -> (i32, i32) {
    %c0_i32 = arith.constant 0 : i32
    %c0_i32_0 = arith.constant 0 : i32
    return %arg0, %c0_i32 : i32, i32
  }
}

</mosaic_0001>

<llo_original>
// kernel: tpu_custom_call.1
$region0: #{tpu_custom_call.1}
  #allocation0 [shape = 'u32[]', space=smem, size = 0x4, offset = 0x4, fixed_abs, tag = 'smem constant byte address 0x4 - core index']
  #allocation1 [shape = 'u32[144,128]{1,0:T(1,128)}', space=vmem, size = 0x12000, scoped, tag = 'internal scratch']
  %s0 = inlined_call_operand.vmem [shape: f32[16,32], index: 0, kind: input, shape index: {}]
  %s1 = inlined_call_operand.vmem [shape: f32[32,128], index: 1, kind: input, shape index: {}]
  %s2 = inlined_call_operand.vmem [shape: f32[1,128], index: 2, kind: input, shape index: {}]
  %s3 = inlined_call_operand.vmem [shape: f32[64,32], index: 3, kind: input, shape index: {}]
  %s4 = inlined_call_operand.vmem [shape: f32[1,32], index: 4, kind: input, shape index: {}]
  %s5 = inlined_call_operand.hbm [shape: f32[16,32], index: 5, kind: output, shape index: {}]
  %s6 = sld [smem:[#allocation0]]
  $region38: #{tpu_custom_call.1} parent=0
    _
  %s8 = ssub.s32 1, %s6
  %s9 = scalar_select 0, %s8, %s6
  $region1: #{tpu_custom_call.1} parent=0
    #allocation2 [shape = 'u8[8192]{0}', space=vmem, size = 0x2000, scoped, tag = 'output window, operand 0, single buffered']
    #allocation3 [shape = 's32[1]{0}', space=sflag, size = 0x4, scoped, tag = 'scoped memory for tpu_custom_call.1']
    %10 = vsyncpa [#allocation3], 0
    // Predicated region
    $region2: #{tpu_custom_call.1} parent=1 // pred_check
      _
    $region3: #{tpu_custom_call.1} parent=1 // pred_check_branch
      %12 = sbr.rel (0) target = $region5
    $region4: #{tpu_custom_call.1} parent=1 // pred_region
      _
    $region5: #{tpu_custom_call.1} parent=1 // pred_fallthru
      _
    // Predicated region
    $region6: #{tpu_custom_call.1} parent=1 // pred_check
      _
    $region7: #{tpu_custom_call.1} parent=1 // pred_check_branch
      %14 = sbr.rel (0) target = $region9
    $region8: #{tpu_custom_call.1} parent=1 // pred_region
      _
    $region9: #{tpu_custom_call.1} parent=1 // pred_fallthru
      _
    // Predicated region
    $region10: #{tpu_custom_call.1} parent=1 // pred_check
      _
    $region11: #{tpu_custom_call.1} parent=1 // pred_check_branch
      %16 = sbr.rel (0) target = $region13
    $region12: #{tpu_custom_call.1} parent=1 // pred_region
      _
    $region13: #{tpu_custom_call.1} parent=1 // pred_fallthru
      _
    // Predicated region
    $region14: #{tpu_custom_call.1} parent=1 // pred_check
      _
    $region15: #{tpu_custom_call.1} parent=1 // pred_check_branch
      %18 = sbr.rel (0) target = $region17
    $region16: #{tpu_custom_call.1} parent=1 // pred_region
      _
    $region17: #{tpu_custom_call.1} parent=1 // pred_fallthru
      _
    // Predicated region
    $region18: #{tpu_custom_call.1} parent=1 // pred_check
      _
    $region19: #{tpu_custom_call.1} parent=1 // pred_check_branch
      %20 = sbr.rel (0) target = $region21
    $region20: #{tpu_custom_call.1} parent=1 // pred_region
      _
    $region21: #{tpu_custom_call.1} parent=1 // pred_fallthru
      _
    %v21 = vld [vmem:[%s0] sm:$0xff]
    %v22 = vld [vmem:[%s0 + $0x8] sm:$0xff]
    %v23 = vld [vmem:[%s1] sm:$0xff]
    %v24 = vld [vmem:[%s1 + $0x8] sm:$0xff]
    %v25 = vld [vmem:[%s1 + $0x10] sm:$0xff]
    %v26 = vld [vmem:[%s1 + $0x18] sm:$0xff]
    %v27 = vld [vmem:[%s2] sm:$0x1]
    %v29 = vlaneseq
    %v30 = vshrl.u32 %v29, 7
    %v31 = vsub.s32 0, %v30
    %v32 = vrot.slane %v27, %v31
    %vm34 = vcmask 261120
    %v36 = vsel %vm34, %v21, 0
    %v39 = vsel %vm34, %v22, 0
    %41 = vmatprep.subr.mxu0 0.0
    %42 = vmatpush1.msra.mxu0 %v23
    %43 = vmatprep.subr.mxu0 0.0
    %44 = vmatpush1.msra.mxu0 %v24
    %45 = vmatprep.subr.mxu0 0.0
    %46 = vmatpush1.msra.mxu0 %v25
    %47 = vmatprep.subr.mxu0 0.0
    %48 = vmatpush1.msra.mxu0 %v26
    %49 = vmatprep.subr.mxu0 0.0
    %50 = vmatpush1.msra.mxu0 0.0
    %51 = vmatprep.subr.mxu0 0.0
    %52 = vmatpush1.msra.mxu0 0.0
    %53 = vmatprep.subr.mxu0 0.0
    %54 = vmatpush1.msra.mxu0 0.0
    %55 = vmatprep.subr.mxu0 0.0
    %56 = vmatpush1.msra.mxu0 0.0
    %57 = vmatprep.subr.mxu0 0.0
    %58 = vmatpush1.msra.mxu0 0.0
    %59 = vmatprep.subr.mxu0 0.0
    %60 = vmatpush1.msra.mxu0 0.0
    %61 = vmatprep.subr.mxu0 0.0
    %62 = vmatpush1.msra.mxu0 0.0
    %63 = vmatprep.subr.mxu0 0.0
    %64 = vmatpush1.msra.mxu0 0.0
    %65 = vmatprep.subr.mxu0 0.0
    %66 = vmatpush1.msra.mxu0 0.0
    %67 = vmatprep.subr.mxu0 0.0
    %68 = vmatpush1.msra.mxu0 0.0
    %69 = vmatprep.subr.mxu0 0.0
    %70 = vmatpush1.msra.mxu0 0.0
    %71 = vmatprep.subr.mxu0 0.0
    %72 = vmatpush1.msra.mxu0 0.0
    %73 = vmatprep.subr.mxu0 0.0
    %74 = vmatpush1.msra.mxu0 0.0
    %75 = vmatprep.subr.mxu0 0.0
    %76 = vmatpush1.msra.mxu0 0.0
    %77 = vmatprep.subr.mxu0 0.0
    %78 = vmatpush1.msra.mxu0 0.0
    %79 = vmatprep.subr.mxu0 0.0
    %80 = vmatpush1.msra.mxu0 0.0
    %81 = vmatprep.subr.mxu0 0.0
    %82 = vmatpush1.msra.mxu0 0.0
    %83 = vmatprep.subr.mxu0 0.0
    %84 = vmatpush1.msra.mxu0 0.0
    %85 = vmatprep.subr.mxu0 0.0
    %86 = vmatpush1.msra.mxu0 0.0
    %87 = vmatprep.subr.mxu0 0.0
    %88 = vmatpush1.msra.mxu0 0.0
    %89 = vmatprep.subr.mxu0 0.0
    %90 = vmatpush1.msra.mxu0 0.0
    %91 = vmatprep.subr.mxu0 0.0
    %92 = vmatpush1.msra.mxu0 0.0
    %93 = vmatprep.subr.mxu0 0.0
    %94 = vmatpush1.msra.mxu0 0.0
    %95 = vmatprep.subr.mxu0 0.0
    %96 = vmatpush1.msra.mxu0 0.0
    %97 = vmatprep.subr.mxu0 0.0
    %98 = vmatpush1.msra.mxu0 0.0
    %99 = vmatprep.subr.mxu0 0.0
    %100 = vmatpush1.msra.mxu0 0.0
    %101 = vmatprep.subr.mxu0 0.0
    %102 = vmatpush1.msra.mxu0 0.0
    %103 = vmatprep.subr.mxu0 0.0
    %104 = vmatpush1.msra.mxu0 0.0
    %105 = vmatprep.mubr.f32.mxu0 0.0
    %106 = vmatmul.mubr.f32.gmra.mrb[0].mxu0 %v36
    %v107 = vpop.f32.mrb[0].mxu0
    %v108 = vadd.f32 %v32, %v107
    %v109 = vpop.f32.mrb[0].mxu0
    %110 = vmatprep.mubr.f32.mxu0 0.0
    %111 = vmatmul.mubr.f32.gmra.mrb[0].mxu0 %v39
    %v112 = vpop.f32.mrb[0].mxu0
    %v113 = vadd.f32 %v32, %v112
    %v114 = vpop.f32.mrb[0].mxu0
    %115 = vdwg.mxu0
    %v116 = vxor.u32 %v108, 2147483648
    %v117 = vxor.u32 %v113, 2147483648
    %v118 = vmul.f32 %v116, 1.442695
    %v119 = vpow.pop %v118
    %v120 = vmul.f32 %v117, 1.442695
    %v121 = vpow.pop %v120
    %v122 = vadd.f32 %v119, 1.0
    %v123 = vadd.f32 %v121, 1.0
    %v124 = vrcp.pop %v122
    %v125 = vmul.f32 1.0, %v124
    %v126 = vrcp.pop %v123
    %v127 = vmul.f32 1.0, %v126
    %v128 = vmul.f32 %v108, %v125
    %v129 = vmul.f32 %v113, %v127
    %132 = vrot.lane.b32.xlu0 %v128, 64
    %v133 = vpop.permute.xlu0 %132
    %134 = vrot.lane.b32.xlu0 %v129, 64
    %v135 = vpop.permute.xlu0 %134
    %v138 = vmul.f32 %v108, %v133
    %v139 = vmul.f32 %v113, %v135
    %v140 = vld [vmem:[%s3] sm:$0xff]
    %v141 = vld [vmem:[%s3 + $0x8] sm:$0xff]
    %v142 = vld [vmem:[%s3 + $0x10] sm:$0xff]
    %v143 = vld [vmem:[%s3 + $0x18] sm:$0xff]
    %v144 = vld [vmem:[%s3 + $0x20] sm:$0xff]
    %v145 = vld [vmem:[%s3 + $0x28] sm:$0xff]
    %v146 = vld [vmem:[%s3 + $0x30] sm:$0xff]
    %v147 = vld [vmem:[%s3 + $0x38] sm:$0xff]
    %vm148 = vcmask 523264
    %v150 = vsel %vm148, %v138, 0
    %v153 = vsel %vm148, %v139, 0
    %155 = vmatprep.subr.mxu0 0.0
    %156 = vmatpush1.msra.mxu0 %v140
    %157 = vmatprep.subr.mxu0 0.0
    %158 = vmatpush1.msra.mxu0 %v141
    %159 = vmatprep.subr.mxu0 0.0
    %160 = vmatpush1.msra.mxu0 %v142
    %161 = vmatprep.subr.mxu0 0.0
    %162 = vmatpush1.msra.mxu0 %v143
    %163 = vmatprep.subr.mxu0 0.0
    %164 = vmatpush1.msra.mxu0 %v144
    %165 = vmatprep.subr.mxu0 0.0
    %166 = vmatpush1.msra.mxu0 %v145
    %167 = vmatprep.subr.mxu0 0.0
    %168 = vmatpush1.msra.mxu0 %v146
    %169 = vmatprep.subr.mxu0 0.0
    %170 = vmatpush1.msra.mxu0 %v147
    %171 = vmatprep.subr.mxu0 0.0
    %172 = vmatpush1.msra.mxu0 0.0
    %173 = vmatprep.subr.mxu0 0.0
    %174 = vmatpush1.msra.mxu0 0.0
    %175 = vmatprep.subr.mxu0 0.0
    %176 = vmatpush1.msra.mxu0 0.0
    %177 = vmatprep.subr.mxu0 0.0
    %178 = vmatpush1.msra.mxu0 0.0
    %179 = vmatprep.subr.mxu0 0.0
    %180 = vmatpush1.msra.mxu0 0.0
    %181 = vmatprep.subr.mxu0 0.0
    %182 = vmatpush1.msra.mxu0 0.0
    %183 = vmatprep.subr.mxu0 0.0
    %184 = vmatpush1.msra.mxu0 0.0
    %185 = vmatprep.subr.mxu0 0.0
    %186 = vmatpush1.msra.mxu0 0.0
    %187 = vmatprep.subr.mxu0 0.0
    %188 = vmatpush1.msra.mxu0 0.0
    %189 = vmatprep.subr.mxu0 0.0
    %190 = vmatpush1.msra.mxu0 0.0
    %191 = vmatprep.subr.mxu0 0.0
    %192 = vmatpush1.msra.mxu0 0.0
    %193 = vmatprep.subr.mxu0 0.0
    %194 = vmatpush1.msra.mxu0 0.0
    %195 = vmatprep.subr.mxu0 0.0
    %196 = vmatpush1.msra.mxu0 0.0
    %197 = vmatprep.subr.mxu0 0.0
    %198 = vmatpush1.msra.mxu0 0.0
    %199 = vmatprep.subr.mxu0 0.0
    %200 = vmatpush1.msra.mxu0 0.0
    %201 = vmatprep.subr.mxu0 0.0
    %202 = vmatpush1.msra.mxu0 0.0
    %203 = vmatprep.subr.mxu0 0.0
    %204 = vmatpush1.msra.mxu0 0.0
    %205 = vmatprep.subr.mxu0 0.0
    %206 = vmatpush1.msra.mxu0 0.0
    %207 = vmatprep.subr.mxu0 0.0
    %208 = vmatpush1.msra.mxu0 0.0
    %209 = vmatprep.subr.mxu0 0.0
    %210 = vmatpush1.msra.mxu0 0.0
    %211 = vmatprep.subr.mxu0 0.0
    %212 = vmatpush1.msra.mxu0 0.0
    %213 = vmatprep.subr.mxu0 0.0
    %214 = vmatpush1.msra.mxu0 0.0
    %215 = vmatprep.subr.mxu0 0.0
    %216 = vmatpush1.msra.mxu0 0.0
    %217 = vmatprep.subr.mxu0 0.0
    %218 = vmatpush1.msra.mxu0 0.0
    %219 = vmatprep.mubr.f32.mxu0 0.0
    %220 = vmatmul.mubr.f32.gmra.mrb[0].mxu0 %v150
    %v221 = vpop.f32.mrb[0].mxu0
    %v222 = vadd.f32 0.0, %v221
    %v223 = vpop.f32.mrb[0].mxu0
    %224 = vmatprep.mubr.f32.mxu0 0.0
    %225 = vmatmul.mubr.f32.gmra.mrb[0].mxu0 %v153
    %v226 = vpop.f32.mrb[0].mxu0
    %v227 = vadd.f32 0.0, %v226
    %v228 = vpop.f32.mrb[0].mxu0
    %229 = vdwg.mxu0
    %p230 = scmp.eq.s32.totalorder 0, 0
    // Predicated region
    $region22: #{tpu_custom_call.1} parent=1 // pred_check
      %p231 = pneg %p230
    $region23: #{tpu_custom_call.1} parent=1 // pred_check_branch
      %233 = sbr.rel (%p231) target = $region25
    $region24: #{tpu_custom_call.1} parent=1 // pred_region
      %v234 = vld [vmem:[%s4] sm:$0x1]
      %v236 = vlaneseq
      %v237 = vshrl.u32 %v236, 7
      %v238 = vsub.s32 0, %v237
      %v239 = vrot.slane %v234, %v238
      %v241 = vadd.f32 %v222, %v239
      %v242 = vadd.f32 %v227, %v239
      %243 = vst.msk [vmem:[#allocation2] sm:$0xff] %vm34, %v241
      %244 = vst.msk [vmem:[#allocation2 + $0x8] sm:$0xff] %vm34, %v242
    $region25: #{tpu_custom_call.1} parent=1 // pred_fallthru
      _
    %p245 = scmp.gt.s32.totalorder 0, 0
    // Predicated region
    $region26: #{tpu_custom_call.1} parent=1 // pred_check
      %p246 = pneg %p245
    $region27: #{tpu_custom_call.1} parent=1 // pred_check_branch
      %248 = sbr.rel (%p246) target = $region29
    $region28: #{tpu_custom_call.1} parent=1 // pred_region
      %v249 = vld [vmem:[#allocation2] sm:$0xff]
      %v250 = vld [vmem:[#allocation2 + $0x8] sm:$0xff]
      %v251 = vadd.f32 %v249, %v222
      %v252 = vadd.f32 %v250, %v227
      %253 = vst.msk [vmem:[#allocation2] sm:$0xff] %vm34, %v251
      %254 = vst.msk [vmem:[#allocation2 + $0x8] sm:$0xff] %vm34, %v252
    $region29: #{tpu_custom_call.1} parent=1 // pred_fallthru
      _
    // Predicated region
    $region30: #{tpu_custom_call.1} parent=1 // pred_check
      _
    $region31: #{tpu_custom_call.1} parent=1 // pred_check_branch
      %256 = sbr.rel (0) target = $region33
    $region32: #{tpu_custom_call.1} parent=1 // pred_region
      %s258 = ssub.s32 256, 256
      %259 = vsyncadd [#allocation3], %s258
      %s260 = sshll.u32 [#allocation2], 4
      %s261 = int_to_ptr.vmem [resolvable:$true] %s260
      %266 = dma.vmem_to_hbm [thread:$0]  %s261, 256, %s5, [#allocation3], 128, 128, 8
    $region33: #{tpu_custom_call.1} parent=1 // pred_fallthru
      _
    // Predicated region
    $region34: #{tpu_custom_call.1} parent=1 // pred_check
      _
    $region35: #{tpu_custom_call.1} parent=1 // pred_check_branch
      %268 = sbr.rel (0) target = $region37
    $region36: #{tpu_custom_call.1} parent=1 // pred_region
      %269 = dma.done [#allocation3], 256
    $region37: #{tpu_custom_call.1} parent=1 // pred_fallthru
      _
    %270 = vsyncpa [#allocation3], 1

</llo_original>
